<compile_context>
chip_gen: v7x
topology: tpu7x:2x2x1
jax: 0.10.0
libtpu: 0.0.40
codegen_flags: <defaults>
</compile_context>

<pallas_src>
import math
import functools
import numpy as np

import jax
import jax.numpy as jnp
from jax.experimental import pallas as pl
from jax.experimental.pallas import tpu as pltpu


# ---------------------------------------------------------------------------
# Kernel: lane-packed value Linear + fused embedding add.
#   x_ref    : (RB, p*fd)   packed value features
#   depe_ref : (RB, p*D)    daytime + weekday + positional + spatial + bias
#   w_ref    : (p*fd, p*D)  block-diagonal value weight (resident)
#   o_ref    : (RB, p*D)    lane-dense output
# ---------------------------------------------------------------------------
def _data_embedding_kernel(x_ref, depe_ref, w_ref, o_ref, *, matmul_dtype):
    res = jnp.dot(x_ref[...].astype(matmul_dtype),
                  w_ref[...].astype(matmul_dtype),
                  preferred_element_type=jnp.float32)
    o_ref[...] = (res + depe_ref[...].astype(jnp.float32)).astype(o_ref.dtype)


def _round_up(v, m):
    return (v + m - 1) // m * m


def _vmem_capacity_bytes():
    try:
        return int(pltpu.get_tpu_info().vmem_capacity_bytes)
    except Exception:
        return 64 << 20                 # conservative (v7x per-core) fallback


def _block_bytes(rows, lane_widths, itemsize=4):
    """VMEM bytes of per-grid-step blocks, including (8,128) tile padding."""
    rp = _round_up(max(rows, 1), 8)
    return sum(itemsize * rp * _round_up(w, 128) for w in lane_widths)


def _choose_rb(mp, lane_widths, budget_bytes):
    """Largest row-block RB dividing mp with RB % 8 == 0 (or RB == mp) whose
    double-buffered, padding-aware blocks fit the budget; prefers an even grid
    with >= 4 steps (>= 2 per v7x TensorCore), then >= 2 steps."""
    divisors = [r for r in range(1, mp + 1)
                if mp % r == 0 and (r % 8 == 0 or r == mp)]
    fitting = [r for r in divisors
               if 2 * _block_bytes(r, lane_widths) <= budget_bytes]
    if not fitting:
        fitting = [min(divisors)]
    for pred in (lambda g: g % 2 == 0 and g >= 4,
                 lambda g: g >= 2,
                 lambda g: True):
        cand = [r for r in fitting if pred(mp // r)]
        if cand:
            return max(cand)
    return max(fitting)


def data_embedding(x, pe, w_val, b_val, dt_table, wk_table, spa_mx, w_se, b_se,
                   *, feature_dim, minute_size,
                   matmul_dtype=jnp.float32, depe_dtype=jnp.float32):
    B, T, N, _ = x.shape
    D = w_val.shape[1]
    fd = feature_dim
    M = B * T * N

    # ---- hoisted gather / broadcast work (plain XLA; fuses into one producer)
    # TODO(synk): per-element nn.Embedding gathers (1440-row daytime table,
    # 7-row weekday table) have no clean Pallas-TPU equivalent; they are done
    # here and streamed to the kernel — together with the positional encoding,
    # the spatial Linear output and the value-Linear bias — as ONE add operand.
    tidx = jnp.clip(jnp.round(x[..., fd] * minute_size).astype(jnp.int32),
                    0, minute_size - 1)                           # (B,T,N)
    widx = jnp.argmax(x[..., fd + 1:fd + 8], axis=-1)             # (B,T,N)
    se = spa_mx.astype(jnp.float32) @ w_se + b_se                 # (N,D)
    de_pe = (dt_table[tidx] + wk_table[widx]
             + pe[:T][None, :, None, :]
             + se[None, None, :, :]
             + b_val[None, None, None, :])                        # (B,T,N,D)

    # ---- lane packing: p consecutive rows per 128-lane slab ------------------
    if D < 128 and 128 % D == 0 and M % (128 // D) == 0:
        p = 128 // D
    else:
        p = 1
    Mp = M // p

    x_packed = x[..., :fd].reshape(Mp, p * fd).astype(jnp.float32)
    depe_packed = de_pe.reshape(Mp, p * D).astype(depe_dtype)
    w_bd = jnp.kron(jnp.eye(p, dtype=jnp.float32),
                    w_val.astype(jnp.float32))                    # (p*fd, p*D)

    # ---- generation-aware VMEM budget / grid sizing ---------------------------
    capacity = _vmem_capacity_bytes()
    budget = min(capacity // 3, 48 << 20)
    lane_widths = [p * fd, p * D, p * D]          # x, de_pe, out per-step blocks
    RB = _choose_rb(Mp, lane_widths, budget)
    G = Mp // RB

    blk_bytes = _block_bytes(RB, lane_widths)
    w_bytes = _block_bytes(p * fd, [p * D])
    vmem_limit = int(min(max(2 * blk_bytes + 2 * w_bytes + (4 << 20), 16 << 20),
                         capacity * 3 // 4))

    kernel = functools.partial(_data_embedding_kernel, matmul_dtype=matmul_dtype)

    out = pl.pallas_call(
        kernel,
        out_shape=jax.ShapeDtypeStruct((Mp, p * D), jnp.float32),
        grid=(G,),
        in_specs=[
            pl.BlockSpec((RB, p * fd), lambda i: (i, 0)),      # packed features
            pl.BlockSpec((RB, p * D), lambda i: (i, 0)),       # fused embedding add
            pl.BlockSpec((p * fd, p * D), lambda i: (0, 0)),   # block-diag weight
        ],
        out_specs=pl.BlockSpec((RB, p * D), lambda i: (i, 0)),
        compiler_params=pltpu.CompilerParams(
            dimension_semantics=("parallel",),
            vmem_limit_bytes=vmem_limit),
    )(x_packed, depe_packed, w_bd)

    return out.reshape(B, T, N, D)


def make_positional_encoding(embed_dim, max_len=100):
    pe = np.zeros((max_len, embed_dim), dtype=np.float32)
    position = np.arange(0, max_len, dtype=np.float32)[:, None]
    div_term = np.exp(np.arange(0, embed_dim, 2, dtype=np.float32)
                      * -(math.log(10000.0) / embed_dim))
    pe[:, 0::2] = np.sin(position * div_term)
    pe[:, 1::2] = np.cos(position * div_term)
    return jnp.asarray(pe)


def reference(x, pe, w_val, b_val, dt_table, wk_table, spa_mx, w_se, b_se,
              *, feature_dim, minute_size):
    val = jnp.einsum('btnf,fd->btnd', x[..., :feature_dim], w_val) + b_val
    pos = pe[:x.shape[1]][None, :, None, :]
    tidx = jnp.round(x[..., feature_dim] * minute_size).astype(jnp.int32)
    de = dt_table[tidx]
    widx = jnp.argmax(x[..., feature_dim + 1:feature_dim + 8], axis=-1)
    we = wk_table[widx]
    se = (spa_mx @ w_se + b_se)[None, None, :, :]
    return val + pos + de + we + se


if __name__ == "__main__":
    B, T, N = 2, 8, 16
    feature_dim, embed_dim, SE_dim = 4, 32, 8
    minute_size = 1440

    key = jax.random.PRNGKey(0)
    ks = jax.random.split(key, 10)

    # input tensor (B, T, N, feature_dim + 1 + 7)
    feats = jax.random.normal(ks[0], (B, T, N, feature_dim), dtype=jnp.float32)
    t_idx = jax.random.randint(ks[1], (B, T, N), 0, minute_size)
    tod = (t_idx.astype(jnp.float32) / minute_size)[..., None]
    w_idx = jax.random.randint(ks[2], (B, T, N), 0, 7)
    dow = jax.nn.one_hot(w_idx, 7, dtype=jnp.float32)
    x = jnp.concatenate([feats, tod, dow], axis=-1)

    spa_mx = jax.random.normal(ks[3], (N, SE_dim), dtype=jnp.float32)

    # deterministic synthetic parameters (shapes match the torch module)
    w_val = jax.random.normal(ks[4], (feature_dim, embed_dim), dtype=jnp.float32) * 0.1
    b_val = jax.random.normal(ks[5], (embed_dim,), dtype=jnp.float32) * 0.1
    dt_table = jax.random.normal(ks[6], (minute_size, embed_dim), dtype=jnp.float32) * 0.1
    wk_table = jax.random.normal(ks[7], (7, embed_dim), dtype=jnp.float32) * 0.1
    w_se = jax.random.normal(ks[8], (SE_dim, embed_dim), dtype=jnp.float32) * 0.1
    b_se = jax.random.normal(ks[9], (embed_dim,), dtype=jnp.float32) * 0.1

    pe = make_positional_encoding(embed_dim, max_len=100)

    out = data_embedding(x, pe, w_val, b_val, dt_table, wk_table, spa_mx, w_se,
                         b_se, feature_dim=feature_dim, minute_size=minute_size)
    out = jax.block_until_ready(out)

    ref = reference(x, pe, w_val, b_val, dt_table, wk_table, spa_mx, w_se, b_se,
                    feature_dim=feature_dim, minute_size=minute_size)
    np.testing.assert_allclose(np.asarray(out), np.asarray(ref),
                               rtol=1e-3, atol=1e-3)

    print("KERNEL_OK")
</pallas_src>

<mosaic_0001>
module attributes {stable_mosaic.version = 11 : i64} {
  func.func @_data_embedding_kernel(%arg0: i32, %arg1: memref<16x16xf32, #tpu.memory_space<vmem>>, %arg2: memref<16x128xf32, #tpu.memory_space<vmem>>, %arg3: memref<16x128xf32, #tpu.memory_space<vmem>>, %arg4: memref<16x128xf32, #tpu.memory_space<vmem>>) attributes {dimension_semantics = [#tpu.dimension_semantics<parallel>], iteration_bounds = array<i64: 4>, scalar_prefetch = 0 : i64, scratch_operands = 0 : i64, tpu.core_type = #tpu.core_type<tc>, window_params = [{transform_indices = @transform_0, window_bounds = array<i64: 16, 16>}, {transform_indices = @transform_1, window_bounds = array<i64: 16, 128>}, {pipeline_mode = #tpu.pipeline_mode<synchronous>, transform_indices = @transform_2, window_bounds = array<i64: 16, 128>}, {transform_indices = @transform_3, window_bounds = array<i64: 16, 128>}]} {
    %c0 = arith.constant 0 : index
    %c0_0 = arith.constant 0 : index
    %0 = vector.load %arg1[%c0, %c0_0] : memref<16x16xf32, #tpu.memory_space<vmem>>, vector<16x16xf32>
    %c0_1 = arith.constant 0 : index
    %c0_2 = arith.constant 0 : index
    %1 = vector.load %arg3[%c0_1, %c0_2] : memref<16x128xf32, #tpu.memory_space<vmem>>, vector<16x128xf32>
    %cst = arith.constant dense<0.000000e+00> : vector<16x128xf32>
    %2 = tpu.matmul %0, %1, %cst {dimension_numbers = #tpu.dot_dimension_numbers<[1], [0], [0], [1], [0, 0, 1, 1], [], []>} : vector<16x16xf32>, vector<16x128xf32>, vector<16x128xf32> -> vector<16x128xf32>
    %c0_3 = arith.constant 0 : index
    %c0_4 = arith.constant 0 : index
    %3 = vector.load %arg2[%c0_3, %c0_4] : memref<16x128xf32, #tpu.memory_space<vmem>>, vector<16x128xf32>
    %4 = arith.addf %2, %3 : vector<16x128xf32>
    %c0_5 = arith.constant 0 : index
    %c0_6 = arith.constant 0 : index
    %5 = vector.load %arg4[%c0_5, %c0_6] : memref<16x128xf32, #tpu.memory_space<vmem>>, vector<16x128xf32>
    tpu.vector_store %arg4[%c0_5, %c0_6], %4 {strides = array<i32>} : memref<16x128xf32, #tpu.memory_space<vmem>>, vector<16x128xf32>,
    return
  }
  func.func @transform_0(%arg0: i32) -> (i32, i32) {
    %c0_i32 = arith.constant 0 : i32
    %c0_i32_0 = arith.constant 0 : i32
    return %arg0, %c0_i32 : i32, i32
  }
  func.func @transform_1(%arg0: i32) -> (i32, i32) {
    %c0_i32 = arith.constant 0 : i32
    %c0_i32_0 = arith.constant 0 : i32
    return %arg0, %c0_i32 : i32, i32
  }
  func.func @transform_2(%arg0: i32) -> (i32, i32) {
    %c0_i32 = arith.constant 0 : i32
    %c0_i32_0 = arith.constant 0 : i32
    %c0_i32_1 = arith.constant 0 : i32
    return %c0_i32, %c0_i32_0 : i32, i32
  }
  func.func @transform_3(%arg0: i32) -> (i32, i32) {
    %c0_i32 = arith.constant 0 : i32
    %c0_i32_0 = arith.constant 0 : i32
    return %arg0, %c0_i32 : i32, i32
  }
}

</mosaic_0001>

<llo_original>
// kernel: tpu_custom_call.1
$region0: #{tpu_custom_call.1}
  #allocation0 [shape = 'u32[]', space=smem, size = 0x4, offset = 0x4, fixed_abs, tag = 'smem constant byte address 0x4 - core index']
  #allocation1 [shape = 'u32[144,128]{1,0:T(1,128)}', space=vmem, size = 0x12000, scoped, tag = 'internal scratch']
  %s0 = inlined_call_operand.vmem [shape: f32[64,16], index: 0, kind: input, shape index: {}]
  %s1 = inlined_call_operand.vmem [shape: f32[64,128], index: 1, kind: input, shape index: {}]
  %s2 = inlined_call_operand.vmem [shape: f32[16,128], index: 2, kind: input, shape index: {}]
  %s3 = inlined_call_operand.hbm [shape: f32[64,128], index: 3, kind: output, shape index: {}]
  %s4 = sld [smem:[#allocation0]]
  $region45: #{tpu_custom_call.1} parent=0
    _
  %s6 = ssub.s32 1, %s4
  %s7 = scalar_select 0, %s6, %s4
  $region1: #{tpu_custom_call.1} parent=0
    #allocation2 [shape = 'u8[16384]{0}', space=vmem, size = 0x4000, scoped, tag = 'output window, operand 0']
    #allocation3 [shape = 's32[2]{0}', space=sflag, size = 0x8, scoped, tag = 'scoped memory for tpu_custom_call.1']
    %8 = vsyncpa [#allocation3], 0
    %s9 = scalar_lea.sflag [#allocation3], 1
    %10 = vsyncpa %s9, 0
    loop: start=0, step=1, limit=6
    $region2: #{tpu_custom_call.1} parent=1 // loop_pre_header
      _
    $region3: #{tpu_custom_call.1} parent=1 // loop_header
      %s12 = sphi 0, %s16
      %p13 = scmp.ge.s32.totalorder %s12, 6
      %s22 = sphi 0, %s24
      %s25 = sphi 0, %s22
      %s26 = sphi 0, %s25
      %s42 = sphi 0, %s26
      %s48 = sphi 0, %s50
      %s51 = sphi 0, %s48
      %s52 = sphi 0, %s51
      %s68 = sphi 0, %s52
      %s72 = sphi 0, %s72
      %s74 = sphi 0, %s72
      %s75 = sphi 0, %s74
      %s89 = sphi 0, %s75
      %s95 = sphi 0, %s97
      %s98 = sphi 0, %s95
      %s99 = sphi 0, %s98
      %s115 = sphi 0, %s99
    $region4: #{tpu_custom_call.1} parent=1 // loop_header_branch
      %15 = sbr.rel (%p13) target = $region8
    $region5: #{tpu_custom_call.1} parent=1 // loop_body
      %s17 = ssub.s32 %s12, 1
      %s18 = ssub.s32 %s12, 2
      %s19 = sadd.s32 %s12, 1
      %s20 = ssub.s32 %s12, %s19
      %p21 = scmp.eq.s32.totalorder %s20, 0
      %s23 = sadd.s32 %s22, 1
      %s24 = scalar_select %p21, %s22, %s23
      %p27 = pneg %p21
      %p28 = scmp.eq.s32.totalorder %s12, 3
      %p29 = por %p27, %p28
      %p30 = scmp.ne.s32.totalorder %s22, %s25
      %p31 = scmp.eq.s32.totalorder %s12, 0
      %p32 = por %p30, %p31
      %p33 = scmp.ne.s32.totalorder %s22, %s25
      %p34 = scmp.eq.s32.totalorder %s17, 3
      %p35 = por %p33, %p34
      %p36 = scmp.ne.s32.totalorder %s25, %s26
      %p37 = scmp.eq.s32.totalorder %s17, 0
      %p38 = por %p36, %p37
      %p39 = scmp.ne.s32.totalorder %s25, %s26
      %p40 = scmp.eq.s32.totalorder %s18, 3
      %p41 = por %p39, %p40
      %p43 = scmp.ne.s32.totalorder %s26, %s42
      %p44 = scmp.eq.s32.totalorder %s18, 0
      %p45 = por %p43, %p44
      %s46 = ssub.s32 %s12, %s19
      %p47 = scmp.eq.s32.totalorder %s46, 0
      %s49 = sadd.s32 %s48, 1
      %s50 = scalar_select %p47, %s48, %s49
      %p53 = pneg %p47
      %p54 = scmp.eq.s32.totalorder %s12, 3
      %p55 = por %p53, %p54
      %p56 = scmp.ne.s32.totalorder %s48, %s51
      %p57 = scmp.eq.s32.totalorder %s12, 0
      %p58 = por %p56, %p57
      %p59 = scmp.ne.s32.totalorder %s48, %s51
      %p60 = scmp.eq.s32.totalorder %s17, 3
      %p61 = por %p59, %p60
      %p62 = scmp.ne.s32.totalorder %s51, %s52
      %p63 = scmp.eq.s32.totalorder %s17, 0
      %p64 = por %p62, %p63
      %p65 = scmp.ne.s32.totalorder %s51, %s52
      %p66 = scmp.eq.s32.totalorder %s18, 3
      %p67 = por %p65, %p66
      %p69 = scmp.ne.s32.totalorder %s52, %s68
      %p70 = scmp.eq.s32.totalorder %s18, 0
      %p71 = por %p69, %p70
      %s73 = sadd.s32 %s72, 1
      %p76 = scmp.eq.s32.totalorder %s12, 3
      %p77 = scmp.ne.s32.totalorder %s72, %s74
      %p78 = scmp.eq.s32.totalorder %s12, 0
      %p79 = por %p77, %p78
      %p80 = scmp.ne.s32.totalorder %s72, %s74
      %p81 = scmp.eq.s32.totalorder %s17, 3
      %p82 = por %p80, %p81
      %p83 = scmp.ne.s32.totalorder %s74, %s75
      %p84 = scmp.eq.s32.totalorder %s17, 0
      %p85 = por %p83, %p84
      %p86 = scmp.ne.s32.totalorder %s74, %s75
      %p87 = scmp.eq.s32.totalorder %s18, 3
      %p88 = por %p86, %p87
      %p90 = scmp.ne.s32.totalorder %s75, %s89
      %p91 = scmp.eq.s32.totalorder %s18, 0
      %p92 = por %p90, %p91
      %s93 = ssub.s32 %s12, %s19
      %p94 = scmp.eq.s32.totalorder %s93, 0
      %s96 = sadd.s32 %s95, 1
      %s97 = scalar_select %p94, %s95, %s96
      %p100 = pneg %p94
      %p101 = scmp.eq.s32.totalorder %s12, 3
      %p102 = por %p100, %p101
      %p103 = scmp.ne.s32.totalorder %s95, %s98
      %p104 = scmp.eq.s32.totalorder %s12, 0
      %p105 = por %p103, %p104
      %p106 = scmp.ne.s32.totalorder %s95, %s98
      %p107 = scmp.eq.s32.totalorder %s17, 3
      %p108 = por %p106, %p107
      %p109 = scmp.ne.s32.totalorder %s98, %s99
      %p110 = scmp.eq.s32.totalorder %s17, 0
      %p111 = por %p109, %p110
      %p112 = scmp.ne.s32.totalorder %s98, %s99
      %p113 = scmp.eq.s32.totalorder %s18, 3
      %p114 = por %p112, %p113
      %p116 = scmp.ne.s32.totalorder %s99, %s115
      %p117 = scmp.eq.s32.totalorder %s18, 0
      %p118 = por %p116, %p117
      %p119 = scmp.le.s32.totalorder 1, %s12
      %p120 = scmp.lt.s32.totalorder %s12, 5
      %p121 = pnand %p119, %p120
      %p122 = pneg %p121
      // Predicated region
      $region9: #{tpu_custom_call.1} parent=5 // pred_check
        _
      $region10: #{tpu_custom_call.1} parent=5 // pred_check_branch
        %124 = sbr.rel (%p121) target = $region12
      $region11: #{tpu_custom_call.1} parent=5 // pred_region
        %s125 = ssub.s32 %s12, 1
        // Predicated region
        $region13: #{tpu_custom_call.1} parent=11 // pred_check
          %p126 = pneg %p85
        $region14: #{tpu_custom_call.1} parent=11 // pred_check_branch
          %128 = sbr.rel (%p126) target = $region16
        $region15: #{tpu_custom_call.1} parent=11 // pred_region
          _
        $region16: #{tpu_custom_call.1} parent=11 // pred_fallthru
          _
      $region12: #{tpu_custom_call.1} parent=5 // pred_fallthru
        _
      %p129 = scmp.lt.s32.totalorder %s12, 4
      // Predicated region
      $region17: #{tpu_custom_call.1} parent=5 // pred_check
        %p130 = pneg %p129
      $region18: #{tpu_custom_call.1} parent=5 // pred_check_branch
        %132 = sbr.rel (%p130) target = $region20
      $region19: #{tpu_custom_call.1} parent=5 // pred_region
        // Predicated region
        $region21: #{tpu_custom_call.1} parent=19 // pred_check
          %p133 = pneg %p32
        $region22: #{tpu_custom_call.1} parent=19 // pred_check_branch
          %135 = sbr.rel (%p133) target = $region24
        $region23: #{tpu_custom_call.1} parent=19 // pred_region
          %s136 = smul.u32 2, %s12
          %p137 = scmp.lt.s32.totalorder %s136, 7
          %s138 = scalar_select %p137, %s136, 7
          %s139 = smul.addr %s138, 8
          %s140 = scalar_lea.vmem %s0, %s139
          %s141 = smul.u32 2, %s12
        $region24: #{tpu_custom_call.1} parent=19 // pred_fallthru
          _
        // Predicated region
        $region25: #{tpu_custom_call.1} parent=19 // pred_check
          %p142 = pneg %p58
        $region26: #{tpu_custom_call.1} parent=19 // pred_check_branch
          %144 = sbr.rel (%p142) target = $region28
        $region27: #{tpu_custom_call.1} parent=19 // pred_region
          %s145 = smul.u32 2, %s12
          %p146 = scmp.lt.s32.totalorder %s145, 7
          %s147 = scalar_select %p146, %s145, 7
          %s148 = smul.addr %s147, 8
          %s149 = scalar_lea.vmem %s1, %s148
          %s150 = smul.u32 2, %s12
        $region28: #{tpu_custom_call.1} parent=19 // pred_fallthru
          _
      $region20: #{tpu_custom_call.1} parent=5 // pred_fallthru
        _
      %p151 = scmp.le.s32.totalorder 1, %s12
      %p152 = scmp.lt.s32.totalorder %s12, 5
      %p153 = pnand %p151, %p152
      %p154 = pneg %p153
      // Predicated region
      $region29: #{tpu_custom_call.1} parent=5 // pred_check
        _
      $region30: #{tpu_custom_call.1} parent=5 // pred_check_branch
        %156 = sbr.rel (%p153) target = $region32
      $region31: #{tpu_custom_call.1} parent=5 // pred_region
        %s157 = ssub.s32 %s12, 1
        %s158 = smul.u32 2, %s17
        %p159 = scmp.lt.s32.totalorder %s158, 7
        %s160 = scalar_select %p159, %s158, 7
        %s161 = smul.addr %s160, 8
        %s162 = scalar_lea.vmem %s0, %s161
        %p163 = pneg %p38
        %p164 = pneg %p35
        %s165 = smul.u32 2, %s17
        %p166 = scmp.lt.s32.totalorder %s165, 7
        %s167 = scalar_select %p166, %s165, 7
        %s168 = smul.addr %s167, 8
        %s169 = scalar_lea.vmem %s1, %s168
        %p170 = pneg %p64
        %p171 = pneg %p61
        %p172 = pneg %p85
        %p173 = pneg %p82
        %p174 = pneg %p111
        %p175 = pneg %p108
        %s176 = sand.u32 %s98, 1
        %s177 = scalar_lea.sflag [#allocation3], %s176
        %s178 = sand.u32 %s98, 1
        %s179 = smul.addr %s178, 16
        %s180 = scalar_lea.vmem [#allocation2], %s179
        %s181 = smul.u32 2, %s17
        %p182 = scmp.lt.s32.totalorder %s181, 7
        %s183 = scalar_select %p182, %s181, 7
        %s184 = smul.addr %s183, 8
        %s185 = scalar_lea.vmem %s0, %s184
        %s186 = smul.u32 2, %s17
        %s187 = smul.u32 2, %s17
        %p188 = scmp.lt.s32.totalorder %s187, 7
        %s189 = scalar_select %p188, %s187, 7
        %s190 = smul.addr %s189, 8
        %s191 = scalar_lea.vmem %s1, %s190
        %s192 = smul.u32 2, %s17
        %s193 = smul.u32 2, %s17
        %v194 = vld [vmem:[%s185] sm:$0xff]
        %v195 = vld [vmem:[%s185 + $0x8] sm:$0xff]
        %v196 = vld [vmem:[%s2] sm:$0xff]
        %v197 = vld [vmem:[%s2 + $0x8] sm:$0xff]
        %v198 = vld [vmem:[%s191] sm:$0xff]
        %v199 = vld [vmem:[%s191 + $0x8] sm:$0xff]
        %vm200 = vcmask 130048
        %v202 = vsel %vm200, %v194, 0
        %v205 = vsel %vm200, %v195, 0
        %207 = vmatprep.subr.mxu0 0.0
        %208 = vmatpush1.msra.mxu0 %v196
        %209 = vmatprep.subr.mxu0 0.0
        %210 = vmatpush1.msra.mxu0 %v197
        %211 = vmatprep.subr.mxu0 0.0
        %212 = vmatpush1.msra.mxu0 0.0
        %213 = vmatprep.subr.mxu0 0.0
        %214 = vmatpush1.msra.mxu0 0.0
        %215 = vmatprep.subr.mxu0 0.0
        %216 = vmatpush1.msra.mxu0 0.0
        %217 = vmatprep.subr.mxu0 0.0
        %218 = vmatpush1.msra.mxu0 0.0
        %219 = vmatprep.subr.mxu0 0.0
        %220 = vmatpush1.msra.mxu0 0.0
        %221 = vmatprep.subr.mxu0 0.0
        %222 = vmatpush1.msra.mxu0 0.0
        %223 = vmatprep.subr.mxu0 0.0
        %224 = vmatpush1.msra.mxu0 0.0
        %225 = vmatprep.subr.mxu0 0.0
        %226 = vmatpush1.msra.mxu0 0.0
        %227 = vmatprep.subr.mxu0 0.0
        %228 = vmatpush1.msra.mxu0 0.0
        %229 = vmatprep.subr.mxu0 0.0
        %230 = vmatpush1.msra.mxu0 0.0
        %231 = vmatprep.subr.mxu0 0.0
        %232 = vmatpush1.msra.mxu0 0.0
        %233 = vmatprep.subr.mxu0 0.0
        %234 = vmatpush1.msra.mxu0 0.0
        %235 = vmatprep.subr.mxu0 0.0
        %236 = vmatpush1.msra.mxu0 0.0
        %237 = vmatprep.subr.mxu0 0.0
        %238 = vmatpush1.msra.mxu0 0.0
        %239 = vmatprep.subr.mxu0 0.0
        %240 = vmatpush1.msra.mxu0 0.0
        %241 = vmatprep.subr.mxu0 0.0
        %242 = vmatpush1.msra.mxu0 0.0
        %243 = vmatprep.subr.mxu0 0.0
        %244 = vmatpush1.msra.mxu0 0.0
        %245 = vmatprep.subr.mxu0 0.0
        %246 = vmatpush1.msra.mxu0 0.0
        %247 = vmatprep.subr.mxu0 0.0
        %248 = vmatpush1.msra.mxu0 0.0
        %249 = vmatprep.subr.mxu0 0.0
        %250 = vmatpush1.msra.mxu0 0.0
        %251 = vmatprep.subr.mxu0 0.0
        %252 = vmatpush1.msra.mxu0 0.0
        %253 = vmatprep.subr.mxu0 0.0
        %254 = vmatpush1.msra.mxu0 0.0
        %255 = vmatprep.subr.mxu0 0.0
        %256 = vmatpush1.msra.mxu0 0.0
        %257 = vmatprep.subr.mxu0 0.0
        %258 = vmatpush1.msra.mxu0 0.0
        %259 = vmatprep.subr.mxu0 0.0
        %260 = vmatpush1.msra.mxu0 0.0
        %261 = vmatprep.subr.mxu0 0.0
        %262 = vmatpush1.msra.mxu0 0.0
        %263 = vmatprep.subr.mxu0 0.0
        %264 = vmatpush1.msra.mxu0 0.0
        %265 = vmatprep.subr.mxu0 0.0
        %266 = vmatpush1.msra.mxu0 0.0
        %267 = vmatprep.subr.mxu0 0.0
        %268 = vmatpush1.msra.mxu0 0.0
        %269 = vmatprep.subr.mxu0 0.0
        %270 = vmatpush1.msra.mxu0 0.0
        %271 = vmatprep.mubr.f32.mxu0 0.0
        %272 = vmatmul.mubr.f32.gmra.mrb[0].mxu0 %v202
        %v273 = vpop.f32.mrb[0].mxu0
        %v274 = vadd.f32 %v198, %v273
        %v275 = vpop.f32.mrb[0].mxu0
        %276 = vmatprep.mubr.f32.mxu0 0.0
        %277 = vmatmul.mubr.f32.gmra.mrb[0].mxu0 %v205
        %v278 = vpop.f32.mrb[0].mxu0
        %v279 = vadd.f32 %v199, %v278
        %v280 = vpop.f32.mrb[0].mxu0
        %281 = vdwg.mxu0
        %282 = vst [vmem:[%s180] sm:$0xff] %v274
        %283 = vst [vmem:[%s180 + $0x8] sm:$0xff] %v279
        %s284 = sand.u32 %s98, 1
        %s285 = scalar_lea.sflag [#allocation3], %s284
        %s286 = sand.u32 %s98, 1
        %s287 = smul.addr %s286, 16
        %s288 = scalar_lea.vmem [#allocation2], %s287
        // Predicated region
        $region33: #{tpu_custom_call.1} parent=31 // pred_check
          %p289 = pneg %p108
        $region34: #{tpu_custom_call.1} parent=31 // pred_check_branch
          %291 = sbr.rel (%p289) target = $region36
        $region35: #{tpu_custom_call.1} parent=31 // pred_region
          %s292 = smul.u32 2, %s17
          %s294 = ssub.s32 256, 256
          %295 = vsyncadd %s285, %s294
          %s296 = smul.addr %s292, 128
          %s297 = scalar_lea.hbm %s3, %s296
          %s298 = sshll.u32 %s288, 4
          %s299 = int_to_ptr.vmem [resolvable:$true] %s298
          %304 = dma.vmem_to_hbm [thread:$0]  %s299, 256, %s297, %s285, 128, 128, 8
        $region36: #{tpu_custom_call.1} parent=31 // pred_fallthru
          _
      $region32: #{tpu_custom_call.1} parent=5 // pred_fallthru
        _
      %p305 = scmp.le.s32.totalorder 2, %s12
      // Predicated region
      $region37: #{tpu_custom_call.1} parent=5 // pred_check
        %p306 = pneg %p305
      $region38: #{tpu_custom_call.1} parent=5 // pred_check_branch
        %308 = sbr.rel (%p306) target = $region40
      $region39: #{tpu_custom_call.1} parent=5 // pred_region
        %s309 = ssub.s32 %s12, 2
        // Predicated region
        $region41: #{tpu_custom_call.1} parent=39 // pred_check
          %p310 = pneg %p114
        $region42: #{tpu_custom_call.1} parent=39 // pred_check_branch
          %312 = sbr.rel (%p310) target = $region44
        $region43: #{tpu_custom_call.1} parent=39 // pred_region
          %s313 = sand.u32 %s99, 1
          %s314 = scalar_lea.sflag [#allocation3], %s313
          %s315 = sand.u32 %s99, 1
          %s316 = smul.addr %s315, 16
          %s317 = scalar_lea.vmem [#allocation2], %s316
          %318 = dma.done %s314, 256
        $region44: #{tpu_custom_call.1} parent=39 // pred_fallthru
          _
      $region40: #{tpu_custom_call.1} parent=5 // pred_fallthru
        _
    $region6: #{tpu_custom_call.1} parent=1 // loop_footer
      %s16 = sadd.s32 1, %s12
    $region7: #{tpu_custom_call.1} parent=1 // loop_footer_branch
      %11 = sbr.rel target = $region3
    $region8: #{tpu_custom_call.1} parent=1 // loop_exit
      _
    %319 = vsyncpa [#allocation3], 1
    %s320 = scalar_lea.sflag [#allocation3], 1
    %321 = vsyncpa %s320, 1

</llo_original>
